<compile_context>
chip_gen: v5e
topology: v5e:2x2
jax: 0.10.0
libtpu: 0.0.40
codegen_flags: <defaults>
</compile_context>

<pallas_src>
import jax
import jax.numpy as jnp
from jax.experimental import pallas as pl
from jax.experimental.pallas import tpu as pltpu


def _critic_kernel(xT_ref, b2eff_ref, w1T_ref, w2hT_ref, pvec_ref, out_ref):
    """Feature-major critic forward.

    xT_ref    : [S, B]    bf16  state, transposed
    b2eff_ref : [H1, B]   f32   b2 + W2_action @ action.T   (action folded in)
    w1T_ref   : [H0, S]   bf16
    w2hT_ref  : [H1, H0]  bf16  state-half of the concat weight
    pvec_ref  : [H, 8]    f32   packed per-feature params
                                col 0=b1, 1=gamma, 2=beta, 3=w3, 4=b3(bcast)
    out_ref   : [1, B]    f32   (wrapper transposes to [B, 1])
    """
    batch = xT_ref.shape[1]
    h0 = w1T_ref.shape[0]
    h1 = w2hT_ref.shape[0]
    inv_b = 1.0 / batch

    p = pvec_ref[...]                                   # one DMA for all small params
    b1 = p[:h0, 0:1]
    gamma = p[:h0, 1:2]
    beta = p[:h0, 2:3]
    w3 = p[:h1, 3:4]
    b3 = p[0:1, 4:5]

    # --- Layer 1: h^T = ReLU(W1 @ x^T + b1)  (bf16 MXU, f32 accumulate) -----
    hT = jnp.dot(w1T_ref[...], xT_ref[...],
                 preferred_element_type=jnp.float32)    # [H0, B] f32
    hT = jnp.maximum(hT + b1, 0.0)

    # --- BatchNorm1d (training mode, batch stats), folded scale/shift -------
    mean = jnp.sum(hT, axis=1, keepdims=True) * inv_b           # [H0, 1]
    ex2 = jnp.sum(hT * hT, axis=1, keepdims=True) * inv_b       # [H0, 1]
    var = jnp.maximum(ex2 - mean * mean, 0.0)                   # clamp cancellation
    scale = gamma * jax.lax.rsqrt(var + 1e-5)                   # [H0, 1]
    shift = beta - mean * scale                                  # [H0, 1]
    hT = hT * scale + shift                                      # single FMA / element

    # --- Layer 2: K=H0 MXU matmul; action term already inside b2eff (f32) ---
    zT = jnp.dot(w2hT_ref[...], hT.astype(jnp.bfloat16),
                 preferred_element_type=jnp.float32)    # [H1, B] f32
    zT = jnp.maximum(zT + b2eff_ref[...], 0.0)

    # --- Layer 3 (H1 -> 1): VPU multiply + sublane reduce (no N=1 MXU pass) -
    out_ref[...] = jnp.sum(zT * w3, axis=0, keepdims=True) + b3  # [1, B]


def critic_forward(state, action, params):
    """Run the Critic forward pass inside one Pallas kernel invocation."""
    batch, state_size = state.shape
    h0 = params["w1T"].shape[0]
    h1 = params["w2hT"].shape[0]

    # Feature-major state (bf16 halves the DMA'd bytes for the MXU operand).
    xT = state.astype(jnp.bfloat16).T                                  # [S, B]
    # Fold the action contribution + b2 into a per-column effective bias (f32).
    b2eff = params["b2"] + params["w2a"] @ action.astype(jnp.float32).T  # [H1, B]

    vmem = pl.BlockSpec(memory_space=pltpu.MemorySpace.VMEM)
    inputs = (xT, b2eff, params["w1T"], params["w2hT"], params["pvec"])

    flops = 2 * batch * (h0 * state_size + h1 * h0) + 12 * batch * h0
    bytes_accessed = (xT.size * 2 + b2eff.size * 4 + params["w1T"].size * 2
                      + params["w2hT"].size * 2 + params["pvec"].size * 4
                      + batch * 4)

    q_row = pl.pallas_call(
        _critic_kernel,
        out_shape=jax.ShapeDtypeStruct((1, batch), jnp.float32),
        in_specs=[vmem] * len(inputs),
        out_specs=vmem,
        cost_estimate=pl.CostEstimate(
            flops=flops, transcendentals=h0, bytes_accessed=bytes_accessed),
    )(*inputs)
    return q_row.T                                                     # [B, 1]


def _xavier_uniform(key, shape, fan_in, fan_out):
    # torch.nn.init.xavier_uniform_ bounds (deterministic via JAX key).
    limit = jnp.sqrt(6.0 / (fan_in + fan_out))
    return jax.random.uniform(key, shape, jnp.float32, -limit, limit)


def init_critic_params(key, state_size, action_size, nodes=(64, 64)):
    h0, h1 = nodes
    k1, k2, k3 = jax.random.split(key, 3)

    # Linear(state_size, h0): xavier weight, bias = 0.1
    w1T = _xavier_uniform(k1, (h0, state_size), state_size, h0)
    b1 = jnp.full((h0, 1), 0.1, jnp.float32)
    gamma = jnp.ones((h0, 1), jnp.float32)           # BatchNorm1d affine defaults
    beta = jnp.zeros((h0, 1), jnp.float32)

    # Linear(h0 + action_size, h1): xavier on the full concat weight, then split.
    w2_full = _xavier_uniform(k2, (h1, h0 + action_size), h0 + action_size, h1)
    w2hT = w2_full[:, :h0]                           # [H1, H0]  -> bf16 MXU weight
    w2a = w2_full[:, h0:]                            # [H1, A]   -> stays f32 (wrapper)
    b2 = jnp.full((h1, 1), 0.1, jnp.float32)

    # Linear(h1, 1): xavier weight
    w3 = _xavier_uniform(k3, (h1, 1), h1, 1)
    b3 = jnp.full((1, 1), 0.1, jnp.float32)

    # Pack the tiny per-feature vectors into one [H, 8] operand (cols:
    # b1, gamma, beta, w3, b3-broadcast) so the kernel issues a single DMA.
    hp = max(h0, h1)
    pvec = jnp.zeros((hp, 8), jnp.float32)
    pvec = pvec.at[:h0, 0:1].set(b1)
    pvec = pvec.at[:h0, 1:2].set(gamma)
    pvec = pvec.at[:h0, 2:3].set(beta)
    pvec = pvec.at[:h1, 3:4].set(w3)
    pvec = pvec.at[:, 4:5].set(b3[0, 0])

    return {
        # Kernel operands
        "w1T": w1T.astype(jnp.bfloat16),             # [H0, S]   bf16 MXU weight
        "w2hT": w2hT.astype(jnp.bfloat16),           # [H1, H0]  bf16 MXU weight
        "pvec": pvec,                                # [H, 8]    packed f32 params
        # Wrapper-side (action path folded into an effective bias in f32)
        "w2a": w2a,                                  # [H1, A]   f32
        "b2": b2,                                    # [H1, 1]   f32
        # Raw copies for the pure-JAX reference
        "b1": b1, "gamma": gamma, "beta": beta, "w3": w3, "b3": b3,
    }


def critic_reference(state, action, params, emulate_bf16=False):
    """Plain-JAX reference. If emulate_bf16, round activations exactly where the
    kernel feeds bf16 to the MXU (state, post-BN h); the action path is f32."""
    def rnd(x):
        return x.astype(jnp.bfloat16).astype(jnp.float32) if emulate_bf16 else x

    w1 = params["w1T"].astype(jnp.float32).T                       # [S, H0]
    w2h = params["w2hT"].astype(jnp.float32).T                     # [H0, H1]
    w2a = params["w2a"].T                                          # [A, H1]

    h = jnp.maximum(rnd(state) @ w1 + params["b1"].T, 0.0)
    mean = jnp.mean(h, axis=0, keepdims=True)
    var = jnp.mean((h - mean) ** 2, axis=0, keepdims=True)
    h = (h - mean) / jnp.sqrt(var + 1e-5)
    h = h * params["gamma"].T + params["beta"].T

    z = jnp.maximum(rnd(h) @ w2h + action @ w2a + params["b2"].T, 0.0)
    return z @ params["w3"] + params["b3"]                         # [B, 1]


if __name__ == "__main__":
    batch = 8
    state_size = 16
    action_size = 4
    nodes = (64, 64)

    key = jax.random.PRNGKey(0)
    k_state, k_action, k_params = jax.random.split(key, 3)

    state = jax.random.normal(k_state, (batch, state_size), jnp.float32)
    action = jax.random.normal(k_action, (batch, action_size), jnp.float32)
    params = init_critic_params(k_params, state_size, action_size, nodes)

    q = jax.block_until_ready(critic_forward(state, action, params))
    assert q.shape == (batch, 1)

    # Tight check against a bf16-matched reference (same MXU input rounding).
    q_ref_bf16 = critic_reference(state, action, params, emulate_bf16=True)
    assert jnp.allclose(q, q_ref_bf16, atol=1e-2, rtol=1e-2), (q, q_ref_bf16)

    # Looser check against the pure-f32 (PyTorch-semantics) reference.
    q_ref_f32 = critic_reference(state, action, params, emulate_bf16=False)
    assert jnp.allclose(q, q_ref_f32, atol=5e-2, rtol=5e-2), (q, q_ref_f32)

    print("KERNEL_OK")
</pallas_src>

<mosaic_0001>
module attributes {stable_mosaic.version = 11 : i64} {
  func.func @_critic_kernel(%arg0: memref<16x8xbf16, #tpu.memory_space<vmem>>, %arg1: memref<64x8xf32, #tpu.memory_space<vmem>>, %arg2: memref<64x16xbf16, #tpu.memory_space<vmem>>, %arg3: memref<64x64xbf16, #tpu.memory_space<vmem>>, %arg4: memref<64x8xf32, #tpu.memory_space<vmem>>, %arg5: memref<1x8xf32, #tpu.memory_space<vmem>>) attributes {dimension_semantics = [], scalar_prefetch = 0 : i64, scratch_operands = 0 : i64, tpu.core_type = #tpu.core_type<tc>} {
    %c0 = arith.constant 0 : index
    %c0_0 = arith.constant 0 : index
    %0 = vector.load %arg4[%c0, %c0_0] : memref<64x8xf32, #tpu.memory_space<vmem>>, vector<64x8xf32>
    %1 = vector.extract_strided_slice %0 {offsets = [0, 0], sizes = [64, 1], strides = [1, 1]} : vector<64x8xf32> to vector<64x1xf32>
    %2 = vector.extract_strided_slice %0 {offsets = [0, 1], sizes = [64, 1], strides = [1, 1]} : vector<64x8xf32> to vector<64x1xf32>
    %3 = vector.extract_strided_slice %0 {offsets = [0, 2], sizes = [64, 1], strides = [1, 1]} : vector<64x8xf32> to vector<64x1xf32>
    %4 = vector.extract_strided_slice %0 {offsets = [0, 3], sizes = [64, 1], strides = [1, 1]} : vector<64x8xf32> to vector<64x1xf32>
    %5 = vector.extract_strided_slice %0 {offsets = [0, 4], sizes = [1, 1], strides = [1, 1]} : vector<64x8xf32> to vector<1x1xf32>
    %c0_1 = arith.constant 0 : index
    %c0_2 = arith.constant 0 : index
    %6 = vector.load %arg2[%c0_1, %c0_2] : memref<64x16xbf16, #tpu.memory_space<vmem>>, vector<64x16xbf16>
    %c0_3 = arith.constant 0 : index
    %c0_4 = arith.constant 0 : index
    %7 = vector.load %arg0[%c0_3, %c0_4] : memref<16x8xbf16, #tpu.memory_space<vmem>>, vector<16x8xbf16>
    %cst = arith.constant dense<0.000000e+00> : vector<64x8xf32>
    %8 = tpu.matmul %6, %7, %cst {dimension_numbers = #tpu.dot_dimension_numbers<[1], [0], [0], [1], [0, 0, 1, 1], [], []>} : vector<64x16xbf16>, vector<16x8xbf16>, vector<64x8xf32> -> vector<64x8xf32>
    %9 = vector.broadcast %1 : vector<64x1xf32> to vector<64x8xf32>
    %10 = arith.addf %8, %9 : vector<64x8xf32>
    %cst_5 = arith.constant 0.000000e+00 : f32
    %11 = vector.broadcast %cst_5 : f32 to vector<64x8xf32>
    %12 = arith.maximumf %10, %11 : vector<64x8xf32>
    %cst_6 = arith.constant dense<0.000000e+00> : vector<64xf32>
    %13 = vector.multi_reduction <add>, %12, %cst_6 [1] : vector<64x8xf32> to vector<64xf32>
    %14 = vector.shape_cast %13 : vector<64xf32> to vector<64x1xf32>
    %cst_7 = arith.constant 1.250000e-01 : f32
    %15 = vector.broadcast %cst_7 : f32 to vector<64x1xf32>
    %16 = arith.mulf %14, %15 : vector<64x1xf32>
    %17 = arith.mulf %12, %12 : vector<64x8xf32>
    %cst_8 = arith.constant dense<0.000000e+00> : vector<64xf32>
    %18 = vector.multi_reduction <add>, %17, %cst_8 [1] : vector<64x8xf32> to vector<64xf32>
    %19 = vector.shape_cast %18 : vector<64xf32> to vector<64x1xf32>
    %cst_9 = arith.constant 1.250000e-01 : f32
    %20 = vector.broadcast %cst_9 : f32 to vector<64x1xf32>
    %21 = arith.mulf %19, %20 : vector<64x1xf32>
    %22 = arith.mulf %16, %16 : vector<64x1xf32>
    %23 = arith.subf %21, %22 : vector<64x1xf32>
    %cst_10 = arith.constant 0.000000e+00 : f32
    %24 = vector.broadcast %cst_10 : f32 to vector<64x1xf32>
    %25 = arith.maximumf %23, %24 : vector<64x1xf32>
    %cst_11 = arith.constant 9.99999974E-6 : f32
    %26 = vector.broadcast %cst_11 : f32 to vector<64x1xf32>
    %27 = arith.addf %25, %26 : vector<64x1xf32>
    %28 = math.rsqrt %27 : vector<64x1xf32>
    %29 = arith.mulf %2, %28 : vector<64x1xf32>
    %30 = arith.mulf %16, %29 : vector<64x1xf32>
    %31 = arith.subf %3, %30 : vector<64x1xf32>
    %32 = vector.broadcast %29 : vector<64x1xf32> to vector<64x8xf32>
    %33 = arith.mulf %12, %32 : vector<64x8xf32>
    %34 = vector.broadcast %31 : vector<64x1xf32> to vector<64x8xf32>
    %35 = arith.addf %33, %34 : vector<64x8xf32>
    %c0_12 = arith.constant 0 : index
    %c0_13 = arith.constant 0 : index
    %36 = vector.load %arg3[%c0_12, %c0_13] : memref<64x64xbf16, #tpu.memory_space<vmem>>, vector<64x64xbf16>
    %37 = arith.truncf %35 : vector<64x8xf32> to vector<64x8xbf16>
    %cst_14 = arith.constant dense<0.000000e+00> : vector<64x8xf32>
    %38 = tpu.matmul %36, %37, %cst_14 {dimension_numbers = #tpu.dot_dimension_numbers<[1], [0], [0], [1], [0, 0, 1, 1], [], []>} : vector<64x64xbf16>, vector<64x8xbf16>, vector<64x8xf32> -> vector<64x8xf32>
    %c0_15 = arith.constant 0 : index
    %c0_16 = arith.constant 0 : index
    %39 = vector.load %arg1[%c0_15, %c0_16] : memref<64x8xf32, #tpu.memory_space<vmem>>, vector<64x8xf32>
    %40 = arith.addf %38, %39 : vector<64x8xf32>
    %cst_17 = arith.constant 0.000000e+00 : f32
    %41 = vector.broadcast %cst_17 : f32 to vector<64x8xf32>
    %42 = arith.maximumf %40, %41 : vector<64x8xf32>
    %43 = vector.broadcast %4 : vector<64x1xf32> to vector<64x8xf32>
    %44 = arith.mulf %42, %43 : vector<64x8xf32>
    %cst_18 = arith.constant dense<0.000000e+00> : vector<8xf32>
    %45 = vector.multi_reduction <add>, %44, %cst_18 [0] : vector<64x8xf32> to vector<8xf32>
    %46 = vector.shape_cast %45 : vector<8xf32> to vector<1x8xf32>
    %47 = vector.broadcast %5 : vector<1x1xf32> to vector<1x8xf32>
    %48 = arith.addf %46, %47 : vector<1x8xf32>
    %c0_19 = arith.constant 0 : index
    %c0_20 = arith.constant 0 : index
    %49 = vector.load %arg5[%c0_19, %c0_20] : memref<1x8xf32, #tpu.memory_space<vmem>>, vector<1x8xf32>
    tpu.vector_store %arg5[%c0_19, %c0_20], %48 {strides = array<i32>} : memref<1x8xf32, #tpu.memory_space<vmem>>, vector<1x8xf32>,
    return
  }
}

</mosaic_0001>

<llo_original>
// kernel: tpu_custom_call.1
$region0: #{tpu_custom_call.1}
  #allocation0 [shape = 'u32[]', space=smem, size = 0x4, offset = 0x4, fixed_abs, tag = 'smem constant byte address 0x4 - core index']
  #allocation1 [shape = 'u32[72,128]{1,0:T(1,128)}', space=vmem, size = 0x9000, scoped, tag = 'internal scratch']
  %s0 = inlined_call_operand.vmem [shape: bf16[16,8], index: 0, kind: input, shape index: {}]
  %s1 = inlined_call_operand.vmem [shape: f32[64,8], index: 1, kind: input, shape index: {}]
  %s2 = inlined_call_operand.vmem [shape: bf16[64,16], index: 2, kind: input, shape index: {}]
  %s3 = inlined_call_operand.vmem [shape: bf16[64,64], index: 3, kind: input, shape index: {}]
  %s4 = inlined_call_operand.vmem [shape: f32[64,8], index: 4, kind: input, shape index: {}]
  %s5 = inlined_call_operand.hbm [shape: f32[1,8], index: 5, kind: output, shape index: {}]
  %s6 = sld [smem:[#allocation0]]
  $region30: #{tpu_custom_call.1} parent=0
    _
  %s8 = ssub.s32 1, %s6
  %s9 = scalar_select 0, %s8, %s6
  $region1: #{tpu_custom_call.1} parent=0
    #allocation2 [shape = 'u8[512]{0}', space=vmem, size = 0x400, scoped, tag = 'output window, operand 0, single buffered']
    #allocation3 [shape = 's32[1]{0}', space=sflag, size = 0x4, scoped, tag = 'scoped memory for tpu_custom_call.1']
    %10 = vsyncpa [#allocation3], 0
    // Predicated region
    $region2: #{tpu_custom_call.1} parent=1 // pred_check
      _
    $region3: #{tpu_custom_call.1} parent=1 // pred_check_branch
      %12 = sbr.rel (0) target = $region5
    $region4: #{tpu_custom_call.1} parent=1 // pred_region
      _
    $region5: #{tpu_custom_call.1} parent=1 // pred_fallthru
      _
    // Predicated region
    $region6: #{tpu_custom_call.1} parent=1 // pred_check
      _
    $region7: #{tpu_custom_call.1} parent=1 // pred_check_branch
      %14 = sbr.rel (0) target = $region9
    $region8: #{tpu_custom_call.1} parent=1 // pred_region
      _
    $region9: #{tpu_custom_call.1} parent=1 // pred_fallthru
      _
    // Predicated region
    $region10: #{tpu_custom_call.1} parent=1 // pred_check
      _
    $region11: #{tpu_custom_call.1} parent=1 // pred_check_branch
      %16 = sbr.rel (0) target = $region13
    $region12: #{tpu_custom_call.1} parent=1 // pred_region
      _
    $region13: #{tpu_custom_call.1} parent=1 // pred_fallthru
      _
    // Predicated region
    $region14: #{tpu_custom_call.1} parent=1 // pred_check
      _
    $region15: #{tpu_custom_call.1} parent=1 // pred_check_branch
      %18 = sbr.rel (0) target = $region17
    $region16: #{tpu_custom_call.1} parent=1 // pred_region
      _
    $region17: #{tpu_custom_call.1} parent=1 // pred_fallthru
      _
    // Predicated region
    $region18: #{tpu_custom_call.1} parent=1 // pred_check
      _
    $region19: #{tpu_custom_call.1} parent=1 // pred_check_branch
      %20 = sbr.rel (0) target = $region21
    $region20: #{tpu_custom_call.1} parent=1 // pred_region
      _
    $region21: #{tpu_custom_call.1} parent=1 // pred_fallthru
      _
    %v22 = vld [vmem:[%s4] sm:$0xff]
    %v23 = vld [vmem:[%s4 + $0x8] sm:$0xff]
    %v24 = vld [vmem:[%s4 + $0x10] sm:$0xff]
    %v25 = vld [vmem:[%s4 + $0x18] sm:$0xff]
    %v26 = vld [vmem:[%s4 + $0x20] sm:$0xff]
    %v27 = vld [vmem:[%s4 + $0x28] sm:$0xff]
    %v28 = vld [vmem:[%s4 + $0x30] sm:$0xff]
    %v29 = vld [vmem:[%s4 + $0x38] sm:$0xff]
    %v30 = vld [vmem:[%s2] sm:$0xf]
    %v31 = vld [vmem:[%s2 + $0x4] sm:$0xf]
    %v32 = vld [vmem:[%s2 + $0x8] sm:$0xf]
    %v33 = vld [vmem:[%s2 + $0xc] sm:$0xf]
    %v34 = vld [vmem:[%s2 + $0x10] sm:$0xf]
    %v35 = vld [vmem:[%s2 + $0x14] sm:$0xf]
    %v36 = vld [vmem:[%s2 + $0x18] sm:$0xf]
    %v37 = vld [vmem:[%s2 + $0x1c] sm:$0xf]
    %v38 = vld [vmem:[%s0] sm:$0xf]
    %v39 = vld [vmem:[%s0 + $0x4] sm:$0xf]
    %41 = vset.pattern.permute.xlu0 0
    %42 = vperm.xlu0 %41, %v22
    %v43 = vpop.permute.xlu0 %42
    %46 = vset.pattern.permute.xlu0 0
    %47 = vperm.xlu0 %46, %v23
    %v48 = vpop.permute.xlu0 %47
    %51 = vset.pattern.permute.xlu0 0
    %52 = vperm.xlu0 %51, %v24
    %v53 = vpop.permute.xlu0 %52
    %56 = vset.pattern.permute.xlu0 0
    %57 = vperm.xlu0 %56, %v25
    %v58 = vpop.permute.xlu0 %57
    %61 = vset.pattern.permute.xlu0 0
    %62 = vperm.xlu0 %61, %v26
    %v63 = vpop.permute.xlu0 %62
    %66 = vset.pattern.permute.xlu0 0
    %67 = vperm.xlu0 %66, %v27
    %v68 = vpop.permute.xlu0 %67
    %71 = vset.pattern.permute.xlu0 0
    %72 = vperm.xlu0 %71, %v28
    %v73 = vpop.permute.xlu0 %72
    %76 = vset.pattern.permute.xlu0 0
    %77 = vperm.xlu0 %76, %v29
    %v78 = vpop.permute.xlu0 %77
    %v88 = vunpack.c.l.b16 %v30
    %v89 = vunpack.c.l.b16 %v31
    %v90 = vunpack.c.l.b16 %v32
    %v91 = vunpack.c.l.b16 %v33
    %v92 = vunpack.c.l.b16 %v34
    %v93 = vunpack.c.l.b16 %v35
    %v94 = vunpack.c.l.b16 %v36
    %v95 = vunpack.c.l.b16 %v37
    %v96 = vpack.c.b16 %v89, %v88
    %v97 = vpack.c.b16 %v91, %v90
    %v98 = vpack.c.b16 %v93, %v92
    %v99 = vpack.c.b16 %v95, %v94
    %v102 = vunpack.c.l.b16 %v38
    %v103 = vunpack.c.l.b16 %v39
    %v104 = vpack.c.b16 %v103, %v102
    %vm106 = vcmask 130048
    %v108 = vsel %vm106, %v96, 0
    %v111 = vsel %vm106, %v97, 0
    %v114 = vsel %vm106, %v98, 0
    %v117 = vsel %vm106, %v99, 0
    %119 = vmatpush.bf16.msra.mxu0 0
    %120 = vmatpush.bf16.msra.mxu0 0
    %121 = vmatpush.bf16.msra.mxu0 0
    %122 = vmatpush.bf16.msra.mxu0 0
    %123 = vmatpush.bf16.msra.mxu0 0
    %124 = vmatpush.bf16.msra.mxu0 0
    %125 = vmatpush.bf16.msra.mxu0 0
    %126 = vmatpush.bf16.msra.mxu0 %v104
    %127 = vmatmul.bf16.gmra.mxu0 %v108
    %v128 = vpop.f32.mrf.mxu0
    %v129 = vadd.f32 %v43, %v128
    %v130 = vpop.f32.mrf.mxu0
    %v131 = vadd.f32 %v48, %v130
    %132 = vmatmul.bf16.gmra.mxu0 %v111
    %v133 = vpop.f32.mrf.mxu0
    %v134 = vadd.f32 %v53, %v133
    %v135 = vpop.f32.mrf.mxu0
    %v136 = vadd.f32 %v58, %v135
    %137 = vmatmul.bf16.gmra.mxu0 %v114
    %v138 = vpop.f32.mrf.mxu0
    %v139 = vadd.f32 %v63, %v138
    %v140 = vpop.f32.mrf.mxu0
    %v141 = vadd.f32 %v68, %v140
    %142 = vmatmul.bf16.gmra.mxu0 %v117
    %v143 = vpop.f32.mrf.mxu0
    %v144 = vadd.f32 %v73, %v143
    %v145 = vpop.f32.mrf.mxu0
    %v146 = vadd.f32 %v78, %v145
    %147 = vdwg.mxu0
    %v148 = vmax.f32 %v129, 0.0
    %v149 = vmax.f32 %v131, 0.0
    %v150 = vmax.f32 %v134, 0.0
    %v151 = vmax.f32 %v136, 0.0
    %v152 = vmax.f32 %v139, 0.0
    %v153 = vmax.f32 %v141, 0.0
    %v154 = vmax.f32 %v144, 0.0
    %v155 = vmax.f32 %v146, 0.0
    %vm156 = vcmask 64512
    %v157 = vsel %vm156, %v148, 0.0
    %158 = vadd.xlane.f32.xlu0 %v157
    %v159 = vpop.xlane.xlu0 %158
    %v160 = vsel %vm156, %v149, 0.0
    %161 = vadd.xlane.f32.xlu0 %v160
    %v162 = vpop.xlane.xlu0 %161
    %v163 = vsel %vm156, %v150, 0.0
    %164 = vadd.xlane.f32.xlu0 %v163
    %v165 = vpop.xlane.xlu0 %164
    %v166 = vsel %vm156, %v151, 0.0
    %167 = vadd.xlane.f32.xlu0 %v166
    %v168 = vpop.xlane.xlu0 %167
    %v169 = vsel %vm156, %v152, 0.0
    %170 = vadd.xlane.f32.xlu0 %v169
    %v171 = vpop.xlane.xlu0 %170
    %v172 = vsel %vm156, %v153, 0.0
    %173 = vadd.xlane.f32.xlu0 %v172
    %v174 = vpop.xlane.xlu0 %173
    %v175 = vsel %vm156, %v154, 0.0
    %176 = vadd.xlane.f32.xlu0 %v175
    %v177 = vpop.xlane.xlu0 %176
    %v178 = vsel %vm156, %v155, 0.0
    %179 = vadd.xlane.f32.xlu0 %v178
    %v180 = vpop.xlane.xlu0 %179
    %v181 = vmul.f32 %v159, 0.125
    %v182 = vmul.f32 %v162, 0.125
    %v183 = vmul.f32 %v165, 0.125
    %v184 = vmul.f32 %v168, 0.125
    %v185 = vmul.f32 %v171, 0.125
    %v186 = vmul.f32 %v174, 0.125
    %v187 = vmul.f32 %v177, 0.125
    %v188 = vmul.f32 %v180, 0.125
    %v189 = vmul.f32 %v148, %v148
    %v190 = vmul.f32 %v149, %v149
    %v191 = vmul.f32 %v150, %v150
    %v192 = vmul.f32 %v151, %v151
    %v193 = vmul.f32 %v152, %v152
    %v194 = vmul.f32 %v153, %v153
    %v195 = vmul.f32 %v154, %v154
    %v196 = vmul.f32 %v155, %v155
    %v197 = vsel %vm156, %v189, 0.0
    %198 = vadd.xlane.f32.xlu0 %v197
    %v199 = vpop.xlane.xlu0 %198
    %v200 = vsel %vm156, %v190, 0.0
    %201 = vadd.xlane.f32.xlu0 %v200
    %v202 = vpop.xlane.xlu0 %201
    %v203 = vsel %vm156, %v191, 0.0
    %204 = vadd.xlane.f32.xlu0 %v203
    %v205 = vpop.xlane.xlu0 %204
    %v206 = vsel %vm156, %v192, 0.0
    %207 = vadd.xlane.f32.xlu0 %v206
    %v208 = vpop.xlane.xlu0 %207
    %v209 = vsel %vm156, %v193, 0.0
    %210 = vadd.xlane.f32.xlu0 %v209
    %v211 = vpop.xlane.xlu0 %210
    %v212 = vsel %vm156, %v194, 0.0
    %213 = vadd.xlane.f32.xlu0 %v212
    %v214 = vpop.xlane.xlu0 %213
    %v215 = vsel %vm156, %v195, 0.0
    %216 = vadd.xlane.f32.xlu0 %v215
    %v217 = vpop.xlane.xlu0 %216
    %v218 = vsel %vm156, %v196, 0.0
    %219 = vadd.xlane.f32.xlu0 %v218
    %v220 = vpop.xlane.xlu0 %219
    %v221 = vmul.f32 %v199, 0.125
    %v222 = vmul.f32 %v202, 0.125
    %v223 = vmul.f32 %v205, 0.125
    %v224 = vmul.f32 %v208, 0.125
    %v225 = vmul.f32 %v211, 0.125
    %v226 = vmul.f32 %v214, 0.125
    %v227 = vmul.f32 %v217, 0.125
    %v228 = vmul.f32 %v220, 0.125
    %v229 = vmul.f32 %v181, %v181
    %v230 = vmul.f32 %v182, %v182
    %v231 = vmul.f32 %v183, %v183
    %v232 = vmul.f32 %v184, %v184
    %v233 = vmul.f32 %v185, %v185
    %v234 = vmul.f32 %v186, %v186
    %v235 = vmul.f32 %v187, %v187
    %v236 = vmul.f32 %v188, %v188
    %v237 = vsub.f32 %v221, %v229
    %v238 = vsub.f32 %v222, %v230
    %v239 = vsub.f32 %v223, %v231
    %v240 = vsub.f32 %v224, %v232
    %v241 = vsub.f32 %v225, %v233
    %v242 = vsub.f32 %v226, %v234
    %v243 = vsub.f32 %v227, %v235
    %v244 = vsub.f32 %v228, %v236
    %v245 = vmax.f32 %v237, 0.0
    %v246 = vmax.f32 %v238, 0.0
    %v247 = vmax.f32 %v239, 0.0
    %v248 = vmax.f32 %v240, 0.0
    %v249 = vmax.f32 %v241, 0.0
    %v250 = vmax.f32 %v242, 0.0
    %v251 = vmax.f32 %v243, 0.0
    %v252 = vmax.f32 %v244, 0.0
    %v253 = vadd.f32 %v245, 1e-05
    %v254 = vadd.f32 %v246, 1e-05
    %v255 = vadd.f32 %v247, 1e-05
    %v256 = vadd.f32 %v248, 1e-05
    %v257 = vadd.f32 %v249, 1e-05
    %v258 = vadd.f32 %v250, 1e-05
    %v259 = vadd.f32 %v251, 1e-05
    %v260 = vadd.f32 %v252, 1e-05
    %v261 = vrsqrt.pop %v253
    %v262 = vmul.f32 %v261, %v253
    %v263 = vmul.f32 %v262, %v261
    %v264 = vmul.f32 0.5, %v263
    %v265 = vsub.f32 1.5, %v264
    %v266 = vmul.f32 %v261, %v265
    %vm267 = vweird.f32 %v253
    %vm268 = vweird.f32 %v261
    %vm269 = vmor %vm267, %vm268
    %v270 = vsel %vm269, %v261, %v266
    %v271 = vrsqrt.pop %v254
    %v272 = vmul.f32 %v271, %v254
    %v273 = vmul.f32 %v272, %v271
    %v274 = vmul.f32 0.5, %v273
    %v275 = vsub.f32 1.5, %v274
    %v276 = vmul.f32 %v271, %v275
    %vm277 = vweird.f32 %v254
    %vm278 = vweird.f32 %v271
    %vm279 = vmor %vm277, %vm278
    %v280 = vsel %vm279, %v271, %v276
    %v281 = vrsqrt.pop %v255
    %v282 = vmul.f32 %v281, %v255
    %v283 = vmul.f32 %v282, %v281
    %v284 = vmul.f32 0.5, %v283
    %v285 = vsub.f32 1.5, %v284
    %v286 = vmul.f32 %v281, %v285
    %vm287 = vweird.f32 %v255
    %vm288 = vweird.f32 %v281
    %vm289 = vmor %vm287, %vm288
    %v290 = vsel %vm289, %v281, %v286
    %v291 = vrsqrt.pop %v256
    %v292 = vmul.f32 %v291, %v256
    %v293 = vmul.f32 %v292, %v291
    %v294 = vmul.f32 0.5, %v293
    %v295 = vsub.f32 1.5, %v294
    %v296 = vmul.f32 %v291, %v295
    %vm297 = vweird.f32 %v256
    %vm298 = vweird.f32 %v291
    %vm299 = vmor %vm297, %vm298
    %v300 = vsel %vm299, %v291, %v296
    %v301 = vrsqrt.pop %v257
    %v302 = vmul.f32 %v301, %v257
    %v303 = vmul.f32 %v302, %v301
    %v304 = vmul.f32 0.5, %v303
    %v305 = vsub.f32 1.5, %v304
    %v306 = vmul.f32 %v301, %v305
    %vm307 = vweird.f32 %v257
    %vm308 = vweird.f32 %v301
    %vm309 = vmor %vm307, %vm308
    %v310 = vsel %vm309, %v301, %v306
    %v311 = vrsqrt.pop %v258
    %v312 = vmul.f32 %v311, %v258
    %v313 = vmul.f32 %v312, %v311
    %v314 = vmul.f32 0.5, %v313
    %v315 = vsub.f32 1.5, %v314
    %v316 = vmul.f32 %v311, %v315
    %vm317 = vweird.f32 %v258
    %vm318 = vweird.f32 %v311
    %vm319 = vmor %vm317, %vm318
    %v320 = vsel %vm319, %v311, %v316
    %v321 = vrsqrt.pop %v259
    %v322 = vmul.f32 %v321, %v259
    %v323 = vmul.f32 %v322, %v321
    %v324 = vmul.f32 0.5, %v323
    %v325 = vsub.f32 1.5, %v324
    %v326 = vmul.f32 %v321, %v325
    %vm327 = vweird.f32 %v259
    %vm328 = vweird.f32 %v321
    %vm329 = vmor %vm327, %vm328
    %v330 = vsel %vm329, %v321, %v326
    %v331 = vrsqrt.pop %v260
    %v332 = vmul.f32 %v331, %v260
    %v333 = vmul.f32 %v332, %v331
    %v334 = vmul.f32 0.5, %v333
    %v335 = vsub.f32 1.5, %v334
    %v336 = vmul.f32 %v331, %v335
    %vm337 = vweird.f32 %v260
    %vm338 = vweird.f32 %v331
    %vm339 = vmor %vm337, %vm338
    %v340 = vsel %vm339, %v331, %v336
    %v341 = vmul.f32 %v22, %v270
    %v342 = vmul.f32 %v23, %v280
    %v343 = vmul.f32 %v24, %v290
    %v344 = vmul.f32 %v25, %v300
    %v345 = vmul.f32 %v26, %v310
    %v346 = vmul.f32 %v27, %v320
    %v347 = vmul.f32 %v28, %v330
    %v348 = vmul.f32 %v29, %v340
    %v349 = vmul.f32 %v181, %v341
    %v350 = vmul.f32 %v182, %v342
    %v351 = vmul.f32 %v183, %v343
    %v352 = vmul.f32 %v184, %v344
    %v353 = vmul.f32 %v185, %v345
    %v354 = vmul.f32 %v186, %v346
    %v355 = vmul.f32 %v187, %v347
    %v356 = vmul.f32 %v188, %v348
    %365 = vrot.lane.b32.xlu0 %v349, 1
    %v366 = vpop.permute.xlu0 %365
    %367 = vrot.lane.b32.xlu0 %v350, 1
    %v368 = vpop.permute.xlu0 %367
    %369 = vrot.lane.b32.xlu0 %v351, 1
    %v370 = vpop.permute.xlu0 %369
    %371 = vrot.lane.b32.xlu0 %v352, 1
    %v372 = vpop.permute.xlu0 %371
    %373 = vrot.lane.b32.xlu0 %v353, 1
    %v374 = vpop.permute.xlu0 %373
    %375 = vrot.lane.b32.xlu0 %v354, 1
    %v376 = vpop.permute.xlu0 %375
    %377 = vrot.lane.b32.xlu0 %v355, 1
    %v378 = vpop.permute.xlu0 %377
    %379 = vrot.lane.b32.xlu0 %v356, 1
    %v380 = vpop.permute.xlu0 %379
    %v389 = vsub.f32 %v22, %v366
    %v390 = vsub.f32 %v23, %v368
    %v391 = vsub.f32 %v24, %v370
    %v392 = vsub.f32 %v25, %v372
    %v393 = vsub.f32 %v26, %v374
    %v394 = vsub.f32 %v27, %v376
    %v395 = vsub.f32 %v28, %v378
    %v396 = vsub.f32 %v29, %v380
    %398 = vset.pattern.permute.xlu0 1
    %399 = vperm.xlu0 %398, %v341
    %v400 = vpop.permute.xlu0 %399
    %403 = vset.pattern.permute.xlu0 1
    %404 = vperm.xlu0 %403, %v342
    %v405 = vpop.permute.xlu0 %404
    %408 = vset.pattern.permute.xlu0 1
    %409 = vperm.xlu0 %408, %v343
    %v410 = vpop.permute.xlu0 %409
    %413 = vset.pattern.permute.xlu0 1
    %414 = vperm.xlu0 %413, %v344
    %v415 = vpop.permute.xlu0 %414
    %418 = vset.pattern.permute.xlu0 1
    %419 = vperm.xlu0 %418, %v345
    %v420 = vpop.permute.xlu0 %419
    %423 = vset.pattern.permute.xlu0 1
    %424 = vperm.xlu0 %423, %v346
    %v425 = vpop.permute.xlu0 %424
    %428 = vset.pattern.permute.xlu0 1
    %429 = vperm.xlu0 %428, %v347
    %v430 = vpop.permute.xlu0 %429
    %433 = vset.pattern.permute.xlu0 1
    %434 = vperm.xlu0 %433, %v348
    %v435 = vpop.permute.xlu0 %434
    %v437 = vmul.f32 %v148, %v400
    %v438 = vmul.f32 %v149, %v405
    %v439 = vmul.f32 %v150, %v410
    %v440 = vmul.f32 %v151, %v415
    %v441 = vmul.f32 %v152, %v420
    %v442 = vmul.f32 %v153, %v425
    %v443 = vmul.f32 %v154, %v430
    %v444 = vmul.f32 %v155, %v435
    %446 = vset.pattern.permute.xlu0 2
    %447 = vperm.xlu0 %446, %v389
    %v448 = vpop.permute.xlu0 %447
    %451 = vset.pattern.permute.xlu0 2
    %452 = vperm.xlu0 %451, %v390
    %v453 = vpop.permute.xlu0 %452
    %456 = vset.pattern.permute.xlu0 2
    %457 = vperm.xlu0 %456, %v391
    %v458 = vpop.permute.xlu0 %457
    %461 = vset.pattern.permute.xlu0 2
    %462 = vperm.xlu0 %461, %v392
    %v463 = vpop.permute.xlu0 %462
    %466 = vset.pattern.permute.xlu0 2
    %467 = vperm.xlu0 %466, %v393
    %v468 = vpop.permute.xlu0 %467
    %471 = vset.pattern.permute.xlu0 2
    %472 = vperm.xlu0 %471, %v394
    %v473 = vpop.permute.xlu0 %472
    %476 = vset.pattern.permute.xlu0 2
    %477 = vperm.xlu0 %476, %v395
    %v478 = vpop.permute.xlu0 %477
    %481 = vset.pattern.permute.xlu0 2
    %482 = vperm.xlu0 %481, %v396
    %v483 = vpop.permute.xlu0 %482
    %v485 = vadd.f32 %v437, %v448
    %v486 = vadd.f32 %v438, %v453
    %v487 = vadd.f32 %v439, %v458
    %v488 = vadd.f32 %v440, %v463
    %v489 = vadd.f32 %v441, %v468
    %v490 = vadd.f32 %v442, %v473
    %v491 = vadd.f32 %v443, %v478
    %v492 = vadd.f32 %v444, %v483
    %v493 = vld [vmem:[%s3] sm:$0xf]
    %v494 = vld [vmem:[%s3 + $0x4] sm:$0xf]
    %v495 = vld [vmem:[%s3 + $0x8] sm:$0xf]
    %v496 = vld [vmem:[%s3 + $0xc] sm:$0xf]
    %v497 = vld [vmem:[%s3 + $0x10] sm:$0xf]
    %v498 = vld [vmem:[%s3 + $0x14] sm:$0xf]
    %v499 = vld [vmem:[%s3 + $0x18] sm:$0xf]
    %v500 = vld [vmem:[%s3 + $0x1c] sm:$0xf]
    %v501 = vpack.c.bf16 %v486, %v485
    %v502 = vpack.c.bf16 %v488, %v487
    %v503 = vpack.c.bf16 %v490, %v489
    %v504 = vpack.c.bf16 %v492, %v491
    %v505 = vld [vmem:[%s1] sm:$0xff]
    %v506 = vld [vmem:[%s1 + $0x8] sm:$0xff]
    %v507 = vld [vmem:[%s1 + $0x10] sm:$0xff]
    %v508 = vld [vmem:[%s1 + $0x18] sm:$0xff]
    %v509 = vld [vmem:[%s1 + $0x20] sm:$0xff]
    %v510 = vld [vmem:[%s1 + $0x28] sm:$0xff]
    %v511 = vld [vmem:[%s1 + $0x30] sm:$0xff]
    %v512 = vld [vmem:[%s1 + $0x38] sm:$0xff]
    %v521 = vunpack.c.l.b16 %v493
    %v522 = vunpack.c.l.b16 %v494
    %v523 = vunpack.c.l.b16 %v495
    %v524 = vunpack.c.l.b16 %v496
    %v525 = vunpack.c.l.b16 %v497
    %v526 = vunpack.c.l.b16 %v498
    %v527 = vunpack.c.l.b16 %v499
    %v528 = vunpack.c.l.b16 %v500
    %v529 = vpack.c.b16 %v522, %v521
    %v530 = vpack.c.b16 %v524, %v523
    %v531 = vpack.c.b16 %v526, %v525
    %v532 = vpack.c.b16 %v528, %v527
    %vm533 = vcmask 523264
    %v535 = vsel %vm533, %v529, 0
    %v538 = vsel %vm533, %v530, 0
    %v541 = vsel %vm533, %v531, 0
    %v544 = vsel %vm533, %v532, 0
    %546 = vmatpush.bf16.msra.mxu0 0
    %547 = vmatpush.bf16.msra.mxu0 0
    %548 = vmatpush.bf16.msra.mxu0 0
    %549 = vmatpush.bf16.msra.mxu0 0
    %550 = vmatpush.bf16.msra.mxu0 %v504
    %551 = vmatpush.bf16.msra.mxu0 %v503
    %552 = vmatpush.bf16.msra.mxu0 %v502
    %553 = vmatpush.bf16.msra.mxu0 %v501
    %554 = vmatmul.bf16.gmra.mxu0 %v535
    %v555 = vpop.f32.mrf.mxu0
    %v556 = vadd.f32 %v505, %v555
    %v557 = vpop.f32.mrf.mxu0
    %v558 = vadd.f32 %v506, %v557
    %559 = vmatmul.bf16.gmra.mxu0 %v538
    %v560 = vpop.f32.mrf.mxu0
    %v561 = vadd.f32 %v507, %v560
    %v562 = vpop.f32.mrf.mxu0
    %v563 = vadd.f32 %v508, %v562
    %564 = vmatmul.bf16.gmra.mxu0 %v541
    %v565 = vpop.f32.mrf.mxu0
    %v566 = vadd.f32 %v509, %v565
    %v567 = vpop.f32.mrf.mxu0
    %v568 = vadd.f32 %v510, %v567
    %569 = vmatmul.bf16.gmra.mxu0 %v544
    %v570 = vpop.f32.mrf.mxu0
    %v571 = vadd.f32 %v511, %v570
    %v572 = vpop.f32.mrf.mxu0
    %v573 = vadd.f32 %v512, %v572
    %574 = vdwg.mxu0
    %v575 = vmax.f32 %v556, 0.0
    %v576 = vmax.f32 %v558, 0.0
    %v577 = vmax.f32 %v561, 0.0
    %v578 = vmax.f32 %v563, 0.0
    %v579 = vmax.f32 %v566, 0.0
    %v580 = vmax.f32 %v568, 0.0
    %v581 = vmax.f32 %v571, 0.0
    %v582 = vmax.f32 %v573, 0.0
    %583 = vset.pattern.permute.xlu0 3
    %584 = vperm.xlu0 %583, %v22
    %v585 = vpop.permute.xlu0 %584
    %587 = vset.pattern.permute.xlu0 3
    %588 = vperm.xlu0 %587, %v23
    %v589 = vpop.permute.xlu0 %588
    %591 = vset.pattern.permute.xlu0 3
    %592 = vperm.xlu0 %591, %v24
    %v593 = vpop.permute.xlu0 %592
    %595 = vset.pattern.permute.xlu0 3
    %596 = vperm.xlu0 %595, %v25
    %v597 = vpop.permute.xlu0 %596
    %599 = vset.pattern.permute.xlu0 3
    %600 = vperm.xlu0 %599, %v26
    %v601 = vpop.permute.xlu0 %600
    %603 = vset.pattern.permute.xlu0 3
    %604 = vperm.xlu0 %603, %v27
    %v605 = vpop.permute.xlu0 %604
    %607 = vset.pattern.permute.xlu0 3
    %608 = vperm.xlu0 %607, %v28
    %v609 = vpop.permute.xlu0 %608
    %611 = vset.pattern.permute.xlu0 3
    %612 = vperm.xlu0 %611, %v29
    %v613 = vpop.permute.xlu0 %612
    %v615 = vmul.f32 %v575, %v585
    %v616 = vmul.f32 %v576, %v589
    %v617 = vmul.f32 %v577, %v593
    %v618 = vmul.f32 %v578, %v597
    %v619 = vmul.f32 %v579, %v601
    %v620 = vmul.f32 %v580, %v605
    %v621 = vmul.f32 %v581, %v609
    %v622 = vmul.f32 %v582, %v613
    %v623 = vsel %vm156, %v615, 0.0
    %v624 = vsel %vm156, %v616, 0.0
    %v625 = vadd.f32 %v623, %v624
    %v626 = vsel %vm156, %v617, 0.0
    %v627 = vadd.f32 %v625, %v626
    %v628 = vsel %vm156, %v618, 0.0
    %v629 = vadd.f32 %v627, %v628
    %v630 = vsel %vm156, %v619, 0.0
    %v631 = vadd.f32 %v629, %v630
    %v632 = vsel %vm156, %v620, 0.0
    %v633 = vadd.f32 %v631, %v632
    %v634 = vsel %vm156, %v621, 0.0
    %v635 = vadd.f32 %v633, %v634
    %v636 = vsel %vm156, %v622, 0.0
    %v637 = vadd.f32 %v635, %v636
    %v638 = vrot.slane %v637, 4
    %v639 = vadd.f32 %v637, %v638
    %v640 = vrot.slane %v639, 2
    %v641 = vadd.f32 %v639, %v640
    %v642 = vrot.slane %v641, 1
    %v643 = vadd.f32 %v641, %v642
    %644 = vset.pattern.permute.xlu0 4
    %645 = vperm.xlu0 %644, %v22
    %v646 = vpop.permute.xlu0 %645
    %v648 = vadd.f32 %v643, %v646
    %vm649 = vcmask 57344
    %650 = vst.msk [vmem:[#allocation2] sm:$0x1] %vm649, %v648
    // Predicated region
    $region22: #{tpu_custom_call.1} parent=1 // pred_check
      _
    $region23: #{tpu_custom_call.1} parent=1 // pred_check_branch
      %652 = sbr.rel (0) target = $region25
    $region24: #{tpu_custom_call.1} parent=1 // pred_region
      %654 = vsyncadd [#allocation3], 0
      %s656 = sshll.u32 [#allocation2], 4
      %s657 = int_to_ptr.vmem [resolvable:$true] %s656
      %s658 = sshll.u32 %s5, 4
      %s659 = int_to_ptr.hbm [resolvable:$true] %s658
      %661 = dma.vmem_to_hbm [thread:$0]  %s657, 16, %s659, [#allocation3]
    $region25: #{tpu_custom_call.1} parent=1 // pred_fallthru
      _
    // Predicated region
    $region26: #{tpu_custom_call.1} parent=1 // pred_check
      _
    $region27: #{tpu_custom_call.1} parent=1 // pred_check_branch
      %663 = sbr.rel (0) target = $region29
    $region28: #{tpu_custom_call.1} parent=1 // pred_region
      %665 = dma.done [#allocation3], 16
    $region29: #{tpu_custom_call.1} parent=1 // pred_fallthru
      _
    %666 = vsyncpa [#allocation3], 1

</llo_original>
